<compile_context>
chip_gen: v6e
topology: v6e:2x2x1
jax: 0.10.0
libtpu: 0.0.40
codegen_flags: <defaults>
</compile_context>

<pallas_src>
import functools

import jax
import jax.numpy as jnp
import numpy as np
from jax.experimental import pallas as pl
from jax.experimental.pallas import tpu as pltpu


def _round_up(x, m):
    return (x + m - 1) // m * m


def _misc_layout(f_dim, g_dim, h1_dim, h2_dim):
    """128-lane-aligned offsets for the packed bias / value-head buffer."""
    off_bf = 0
    off_bg = _round_up(off_bf + f_dim, 128)
    off_b1 = _round_up(off_bg + g_dim, 128)
    off_b2 = _round_up(off_b1 + h1_dim, 128)
    off_wv = _round_up(off_b2 + h2_dim, 128)
    off_bv = _round_up(off_wv + h2_dim, 128)
    width = _round_up(off_bv + 1, 128)
    return dict(off_bf=off_bf, off_bg=off_bg, off_b1=off_b1, off_b2=off_b2,
                off_wv=off_wv, off_bv=off_bv, width=width,
                F=f_dim, GH=g_dim, H1=h1_dim, H2=h2_dim)


# ---------------------------------------------------------------------------
# Kernel: one batch tile of the fused critic forward.
#   local_ref (TB, L)            f32   obs['local_info']
#   glob_ref  (TB, G)            f32   obs['global_info'] flattened
#   wf_ref    (L, F)             bf16  FeatureNet linear
#   wg_ref    (G, 256)           bf16  global_feature_net
#   w1a_ref   (F, H1)            bf16  hidden layer 1, rows for local feat
#   w1b_ref   (256, H1)          bf16  hidden layer 1, rows for global feat
#   w2_ref    (H1, H2)           bf16  hidden layer 2
#   misc_ref  (1, lay['width'])  f32   packed biases + value-head row + bias
#   out_ref   (TB, 1)            f32   value
# ---------------------------------------------------------------------------
def critic_kernel(local_ref, glob_ref, wf_ref, wg_ref, w1a_ref, w1b_ref,
                  w2_ref, misc_ref, out_ref, *, lay):
    f32 = jnp.float32
    bf16 = jnp.bfloat16

    bf = misc_ref[:, lay["off_bf"]:lay["off_bf"] + lay["F"]]
    bg = misc_ref[:, lay["off_bg"]:lay["off_bg"] + lay["GH"]]
    b1 = misc_ref[:, lay["off_b1"]:lay["off_b1"] + lay["H1"]]
    b2 = misc_ref[:, lay["off_b2"]:lay["off_b2"] + lay["H2"]]
    wv = misc_ref[:, lay["off_wv"]:lay["off_wv"] + lay["H2"]]       # (1, H2)
    bv = misc_ref[:, lay["off_bv"]:lay["off_bv"] + 1]               # (1, 1)

    # FeatureNet (approx) and global_feature_net, each Linear + ReLU.
    lf = jnp.maximum(
        jnp.dot(local_ref[...].astype(bf16), wf_ref[...],
                preferred_element_type=f32) + bf, 0.0)
    gf = jnp.maximum(
        jnp.dot(glob_ref[...].astype(bf16), wg_ref[...],
                preferred_element_type=f32) + bg, 0.0)

    # Hidden layer 1 (+ ReLU): split-w1 form avoids materializing the concat
    # [local_feat | global_feat].
    h1 = (jnp.dot(lf.astype(bf16), w1a_ref[...], preferred_element_type=f32)
          + jnp.dot(gf.astype(bf16), w1b_ref[...], preferred_element_type=f32))
    h1 = jnp.maximum(h1 + b1, 0.0)

    # Hidden layer 2 (mlp(..., last_relu=True)).
    h2 = jnp.dot(h1.astype(bf16), w2_ref[...], preferred_element_type=f32)
    h2 = jnp.maximum(h2 + b2, 0.0)

    # Value head: N=1 matmul replaced by VPU multiply + lane reduction.
    value = jnp.sum(h2 * wv, axis=-1, keepdims=True) + bv           # (TB, 1)
    out_ref[...] = value


# ---------------------------------------------------------------------------
# Parameter packing (done once on the host / wrapper side).
# ---------------------------------------------------------------------------
def pack_params(params):
    wf, bf = params["wf"], params["bf"]      # (L, F),      (1, F)
    wg, bg = params["wg"], params["bg"]      # (G, 256),    (1, 256)
    w1, b1 = params["w1"], params["b1"]      # (F+256, H1), (1, H1)
    w2, b2 = params["w2"], params["b2"]      # (H1, H2),    (1, H2)
    wv, bv = params["wv"], params["bv"]      # (H2, 1),     (1, 1)
    L, F = wf.shape
    G, GH = wg.shape
    H1, H2 = w2.shape
    lay = _misc_layout(F, GH, H1, H2)

    misc = jnp.zeros((1, lay["width"]), jnp.float32)
    misc = misc.at[:, lay["off_bf"]:lay["off_bf"] + F].set(bf)
    misc = misc.at[:, lay["off_bg"]:lay["off_bg"] + GH].set(bg)
    misc = misc.at[:, lay["off_b1"]:lay["off_b1"] + H1].set(b1)
    misc = misc.at[:, lay["off_b2"]:lay["off_b2"] + H2].set(b2)
    misc = misc.at[:, lay["off_wv"]:lay["off_wv"] + H2].set(wv.T)
    misc = misc.at[:, lay["off_bv"]:lay["off_bv"] + 1].set(bv)

    return dict(wf=wf.astype(jnp.bfloat16),
                wg=wg.astype(jnp.bfloat16),
                w1a=w1[:F, :].astype(jnp.bfloat16),      # rows for local feat
                w1b=w1[F:, :].astype(jnp.bfloat16),      # rows for global feat
                w2=w2.astype(jnp.bfloat16),
                misc=misc, layout=lay)


# ---------------------------------------------------------------------------
# Forward wrapper.
# ---------------------------------------------------------------------------
def ppo_central_critic_forward(local_obs, global_obs, packed, *, batch_tile=1024):
    B = local_obs.shape[0]
    g_flat = global_obs.reshape(B, -1)       # contiguous reshape: no HBM copy
    L = local_obs.shape[1]
    G = g_flat.shape[1]

    wf, wg, w1a, w1b, w2, misc = (packed["wf"], packed["wg"], packed["w1a"],
                                  packed["w1b"], packed["w2"], packed["misc"])
    lay = packed["layout"]
    F, GH, H1, H2 = lay["F"], lay["GH"], lay["H1"], lay["H2"]

    # Batch tile: multiple of 16 (bf16 sublane pairs); weights stay resident
    # across grid steps.  VMEM use at tb=1024 is a few MiB -> fine on all of
    # v5e / v6e / v7x; the "parallel" axis shards steps across v7x's 2 TCs.
    tb = min(batch_tile, _round_up(B, 16))
    bp = _round_up(B, tb)
    if bp != B:
        local_obs = jnp.pad(local_obs, ((0, bp - B), (0, 0)))
        g_flat = jnp.pad(g_flat, ((0, bp - B), (0, 0)))

    flops = 2 * bp * (L * F + G * GH + F * H1 + GH * H1 + H1 * H2 + H2)
    weight_bytes = 2 * (wf.size + wg.size + w1a.size + w1b.size + w2.size) \
        + 4 * misc.size
    bytes_accessed = bp * (L + G) * 4 + bp * 4 + weight_bytes

    kernel = functools.partial(critic_kernel, lay=lay)
    out = pl.pallas_call(
        kernel,
        out_shape=jax.ShapeDtypeStruct((bp, 1), jnp.float32),
        grid=(bp // tb,),
        in_specs=[
            pl.BlockSpec((tb, L), lambda i: (i, 0)),
            pl.BlockSpec((tb, G), lambda i: (i, 0)),
            pl.BlockSpec(wf.shape, lambda i: (0, 0)),     # weights: DMA once,
            pl.BlockSpec(wg.shape, lambda i: (0, 0)),     # stay VMEM-resident
            pl.BlockSpec(w1a.shape, lambda i: (0, 0)),
            pl.BlockSpec(w1b.shape, lambda i: (0, 0)),
            pl.BlockSpec(w2.shape, lambda i: (0, 0)),
            pl.BlockSpec(misc.shape, lambda i: (0, 0)),
        ],
        # (tb, 1): last dim equals full array dim -> (8,128) rule satisfied.
        out_specs=pl.BlockSpec((tb, 1), lambda i: (i, 0)),
        compiler_params=pltpu.CompilerParams(
            dimension_semantics=("parallel",)),
        cost_estimate=pl.CostEstimate(flops=flops, transcendentals=0,
                                      bytes_accessed=bytes_accessed),
    )(local_obs, g_flat, wf, wg, w1a, w1b, w2, misc)
    return out[:B, :]


# ---------------------------------------------------------------------------
# Init + references
# ---------------------------------------------------------------------------
def _init_linear(key, in_dim, out_dim):
    kw, kb = jax.random.split(key)
    scale = 1.0 / np.sqrt(in_dim)
    w = jax.random.uniform(kw, (in_dim, out_dim), jnp.float32, -scale, scale)
    b = jax.random.uniform(kb, (1, out_dim), jnp.float32, -scale, scale)
    return w, b


def _reference_f32(local_obs, global_obs_flat, p):
    """Original module math in f32."""
    lf = jax.nn.relu(local_obs @ p["wf"] + p["bf"])
    gf = jax.nn.relu(global_obs_flat @ p["wg"] + p["bg"])
    full = jnp.concatenate([lf, gf], axis=1)
    h1 = jax.nn.relu(full @ p["w1"] + p["b1"])
    h2 = jax.nn.relu(h1 @ p["w2"] + p["b2"])
    return h2 @ p["wv"] + p["bv"]


def _reference_packed_math(local_obs, global_obs, packed, params):
    """Exact mirror of the kernel math (bf16 matmul operands, f32 accum)."""
    B = local_obs.shape[0]
    bf16, f32 = jnp.bfloat16, jnp.float32
    g = global_obs.reshape(B, -1)
    lf = jax.nn.relu(
        jnp.dot(local_obs.astype(bf16), packed["wf"],
                preferred_element_type=f32) + params["bf"])
    gf = jax.nn.relu(
        jnp.dot(g.astype(bf16), packed["wg"],
                preferred_element_type=f32) + params["bg"])
    h1 = jax.nn.relu(
        jnp.dot(lf.astype(bf16), packed["w1a"], preferred_element_type=f32)
        + jnp.dot(gf.astype(bf16), packed["w1b"], preferred_element_type=f32)
        + params["b1"])
    h2 = jax.nn.relu(
        jnp.dot(h1.astype(bf16), packed["w2"],
                preferred_element_type=f32) + params["b2"])
    return jnp.sum(h2 * params["wv"].T, axis=-1, keepdims=True) + params["bv"]


if __name__ == "__main__":
    # Small config consistent with the module:
    #   feature_dim=32, global_info_shape=(4,16) -> 64, hidden_dims=[64,64]
    B = 8
    local_dim = 32
    feature_dim = 32
    global_info_shape = (4, 16)
    global_feature_dim = int(np.prod(global_info_shape))     # 64
    global_hidden = 256
    hidden_dims = [64, 64]

    key = jax.random.PRNGKey(0)
    keys = jax.random.split(key, 8)

    wf, bf = _init_linear(keys[0], local_dim, feature_dim)           # FeatureNet approx
    wg, bg = _init_linear(keys[1], global_feature_dim, global_hidden)
    w1, b1 = _init_linear(keys[2], feature_dim + global_hidden, hidden_dims[0])
    w2, b2 = _init_linear(keys[3], hidden_dims[0], hidden_dims[1])
    wv, bv = _init_linear(keys[4], hidden_dims[1], 1)

    params = dict(wf=wf, bf=bf, wg=wg, bg=bg, w1=w1, b1=b1,
                  w2=w2, b2=b2, wv=wv, bv=bv)
    packed = pack_params(params)

    # obs['local_info'] (B, local_dim); obs['global_info'] (B, 4, 16)
    local_obs = jax.random.normal(keys[5], (B, local_dim), jnp.float32)
    global_obs = jax.random.normal(keys[6], (B,) + global_info_shape, jnp.float32)

    value = ppo_central_critic_forward(local_obs, global_obs, packed)
    value = jax.block_until_ready(value)
    assert value.shape == (B, 1)

    # Check 1: exact mirror of the kernel math (bf16 operands, f32 accum).
    ref_packed = _reference_packed_math(local_obs, global_obs, packed, params)
    np.testing.assert_allclose(np.asarray(value), np.asarray(ref_packed),
                               rtol=5e-3, atol=5e-3)
    # Check 2: original f32 module semantics (loose tol for bf16 weights).
    ref_f32 = _reference_f32(local_obs, global_obs.reshape(B, -1), params)
    np.testing.assert_allclose(np.asarray(value), np.asarray(ref_f32),
                               rtol=5e-2, atol=5e-2)
    print("KERNEL_OK")
</pallas_src>

<mosaic_0001>
module attributes {stable_mosaic.version = 11 : i64} {
  func.func @critic_kernel(%arg0: i32, %arg1: memref<16x32xf32, #tpu.memory_space<vmem>>, %arg2: memref<16x64xf32, #tpu.memory_space<vmem>>, %arg3: memref<32x32xbf16, #tpu.memory_space<vmem>>, %arg4: memref<64x256xbf16, #tpu.memory_space<vmem>>, %arg5: memref<32x64xbf16, #tpu.memory_space<vmem>>, %arg6: memref<256x64xbf16, #tpu.memory_space<vmem>>, %arg7: memref<64x64xbf16, #tpu.memory_space<vmem>>, %arg8: memref<1x896xf32, #tpu.memory_space<vmem>>, %arg9: memref<16x1xf32, #tpu.memory_space<vmem>>) attributes {dimension_semantics = [#tpu.dimension_semantics<parallel>], iteration_bounds = array<i64: 1>, scalar_prefetch = 0 : i64, scratch_operands = 0 : i64, tpu.core_type = #tpu.core_type<tc>, window_params = [{transform_indices = @transform_0, window_bounds = array<i64: 16, 32>}, {transform_indices = @transform_1, window_bounds = array<i64: 16, 64>}, {pipeline_mode = #tpu.pipeline_mode<synchronous>, transform_indices = @transform_2, window_bounds = array<i64: 32, 32>}, {pipeline_mode = #tpu.pipeline_mode<synchronous>, transform_indices = @transform_3, window_bounds = array<i64: 64, 256>}, {pipeline_mode = #tpu.pipeline_mode<synchronous>, transform_indices = @transform_4, window_bounds = array<i64: 32, 64>}, {pipeline_mode = #tpu.pipeline_mode<synchronous>, transform_indices = @transform_5, window_bounds = array<i64: 256, 64>}, {pipeline_mode = #tpu.pipeline_mode<synchronous>, transform_indices = @transform_6, window_bounds = array<i64: 64, 64>}, {pipeline_mode = #tpu.pipeline_mode<synchronous>, transform_indices = @transform_7, window_bounds = array<i64: 1, 896>}, {transform_indices = @transform_8, window_bounds = array<i64: 16, 1>}]} {
    %c0 = arith.constant 0 : index
    %c0_0 = arith.constant 0 : index
    %0 = vector.load %arg8[%c0, %c0_0] : memref<1x896xf32, #tpu.memory_space<vmem>>, vector<1x32xf32>
    %c0_1 = arith.constant 0 : index
    %c128 = arith.constant 128 : index
    %1 = vector.load %arg8[%c0_1, %c128] : memref<1x896xf32, #tpu.memory_space<vmem>>, vector<1x256xf32>
    %c0_2 = arith.constant 0 : index
    %c384 = arith.constant 384 : index
    %2 = vector.load %arg8[%c0_2, %c384] : memref<1x896xf32, #tpu.memory_space<vmem>>, vector<1x64xf32>
    %c0_3 = arith.constant 0 : index
    %c512 = arith.constant 512 : index
    %3 = vector.load %arg8[%c0_3, %c512] : memref<1x896xf32, #tpu.memory_space<vmem>>, vector<1x64xf32>
    %c0_4 = arith.constant 0 : index
    %c640 = arith.constant 640 : index
    %4 = vector.load %arg8[%c0_4, %c640] : memref<1x896xf32, #tpu.memory_space<vmem>>, vector<1x64xf32>
    %c0_5 = arith.constant 0 : index
    %c768 = arith.constant 768 : index
    %5 = vector.load %arg8[%c0_5, %c768] : memref<1x896xf32, #tpu.memory_space<vmem>>, vector<1x1xf32>
    %c0_6 = arith.constant 0 : index
    %c0_7 = arith.constant 0 : index
    %6 = vector.load %arg1[%c0_6, %c0_7] : memref<16x32xf32, #tpu.memory_space<vmem>>, vector<16x32xf32>
    %7 = arith.truncf %6 : vector<16x32xf32> to vector<16x32xbf16>
    %c0_8 = arith.constant 0 : index
    %c0_9 = arith.constant 0 : index
    %8 = vector.load %arg3[%c0_8, %c0_9] : memref<32x32xbf16, #tpu.memory_space<vmem>>, vector<32x32xbf16>
    %cst = arith.constant dense<0.000000e+00> : vector<16x32xf32>
    %9 = tpu.matmul %7, %8, %cst {dimension_numbers = #tpu.dot_dimension_numbers<[1], [0], [0], [1], [0, 0, 1, 1], [], []>} : vector<16x32xbf16>, vector<32x32xbf16>, vector<16x32xf32> -> vector<16x32xf32>
    %10 = vector.broadcast %0 : vector<1x32xf32> to vector<16x32xf32>
    %11 = arith.addf %9, %10 : vector<16x32xf32>
    %cst_10 = arith.constant 0.000000e+00 : f32
    %12 = vector.broadcast %cst_10 : f32 to vector<16x32xf32>
    %13 = arith.maximumf %11, %12 : vector<16x32xf32>
    %c0_11 = arith.constant 0 : index
    %c0_12 = arith.constant 0 : index
    %14 = vector.load %arg2[%c0_11, %c0_12] : memref<16x64xf32, #tpu.memory_space<vmem>>, vector<16x64xf32>
    %15 = arith.truncf %14 : vector<16x64xf32> to vector<16x64xbf16>
    %c0_13 = arith.constant 0 : index
    %c0_14 = arith.constant 0 : index
    %16 = vector.load %arg4[%c0_13, %c0_14] : memref<64x256xbf16, #tpu.memory_space<vmem>>, vector<64x256xbf16>
    %cst_15 = arith.constant dense<0.000000e+00> : vector<16x256xf32>
    %17 = tpu.matmul %15, %16, %cst_15 {dimension_numbers = #tpu.dot_dimension_numbers<[1], [0], [0], [1], [0, 0, 1, 1], [], []>} : vector<16x64xbf16>, vector<64x256xbf16>, vector<16x256xf32> -> vector<16x256xf32>
    %18 = vector.broadcast %1 : vector<1x256xf32> to vector<16x256xf32>
    %19 = arith.addf %17, %18 : vector<16x256xf32>
    %cst_16 = arith.constant 0.000000e+00 : f32
    %20 = vector.broadcast %cst_16 : f32 to vector<16x256xf32>
    %21 = arith.maximumf %19, %20 : vector<16x256xf32>
    %22 = arith.truncf %13 : vector<16x32xf32> to vector<16x32xbf16>
    %c0_17 = arith.constant 0 : index
    %c0_18 = arith.constant 0 : index
    %23 = vector.load %arg5[%c0_17, %c0_18] : memref<32x64xbf16, #tpu.memory_space<vmem>>, vector<32x64xbf16>
    %cst_19 = arith.constant dense<0.000000e+00> : vector<16x64xf32>
    %24 = tpu.matmul %22, %23, %cst_19 {dimension_numbers = #tpu.dot_dimension_numbers<[1], [0], [0], [1], [0, 0, 1, 1], [], []>} : vector<16x32xbf16>, vector<32x64xbf16>, vector<16x64xf32> -> vector<16x64xf32>
    %25 = arith.truncf %21 : vector<16x256xf32> to vector<16x256xbf16>
    %c0_20 = arith.constant 0 : index
    %c0_21 = arith.constant 0 : index
    %26 = vector.load %arg6[%c0_20, %c0_21] : memref<256x64xbf16, #tpu.memory_space<vmem>>, vector<256x64xbf16>
    %cst_22 = arith.constant dense<0.000000e+00> : vector<16x64xf32>
    %27 = tpu.matmul %25, %26, %cst_22 {dimension_numbers = #tpu.dot_dimension_numbers<[1], [0], [0], [1], [0, 0, 1, 1], [], []>} : vector<16x256xbf16>, vector<256x64xbf16>, vector<16x64xf32> -> vector<16x64xf32>
    %28 = arith.addf %24, %27 : vector<16x64xf32>
    %29 = vector.broadcast %2 : vector<1x64xf32> to vector<16x64xf32>
    %30 = arith.addf %28, %29 : vector<16x64xf32>
    %cst_23 = arith.constant 0.000000e+00 : f32
    %31 = vector.broadcast %cst_23 : f32 to vector<16x64xf32>
    %32 = arith.maximumf %30, %31 : vector<16x64xf32>
    %33 = arith.truncf %32 : vector<16x64xf32> to vector<16x64xbf16>
    %c0_24 = arith.constant 0 : index
    %c0_25 = arith.constant 0 : index
    %34 = vector.load %arg7[%c0_24, %c0_25] : memref<64x64xbf16, #tpu.memory_space<vmem>>, vector<64x64xbf16>
    %cst_26 = arith.constant dense<0.000000e+00> : vector<16x64xf32>
    %35 = tpu.matmul %33, %34, %cst_26 {dimension_numbers = #tpu.dot_dimension_numbers<[1], [0], [0], [1], [0, 0, 1, 1], [], []>} : vector<16x64xbf16>, vector<64x64xbf16>, vector<16x64xf32> -> vector<16x64xf32>
    %36 = vector.broadcast %3 : vector<1x64xf32> to vector<16x64xf32>
    %37 = arith.addf %35, %36 : vector<16x64xf32>
    %cst_27 = arith.constant 0.000000e+00 : f32
    %38 = vector.broadcast %cst_27 : f32 to vector<16x64xf32>
    %39 = arith.maximumf %37, %38 : vector<16x64xf32>
    %40 = vector.broadcast %4 : vector<1x64xf32> to vector<16x64xf32>
    %41 = arith.mulf %39, %40 : vector<16x64xf32>
    %cst_28 = arith.constant dense<0.000000e+00> : vector<16xf32>
    %42 = vector.multi_reduction <add>, %41, %cst_28 [1] : vector<16x64xf32> to vector<16xf32>
    %43 = vector.shape_cast %42 : vector<16xf32> to vector<16x1xf32>
    %44 = vector.broadcast %5 : vector<1x1xf32> to vector<16x1xf32>
    %45 = arith.addf %43, %44 : vector<16x1xf32>
    %c0_29 = arith.constant 0 : index
    %c0_30 = arith.constant 0 : index
    %46 = vector.load %arg9[%c0_29, %c0_30] : memref<16x1xf32, #tpu.memory_space<vmem>>, vector<16x1xf32>
    tpu.vector_store %arg9[%c0_29, %c0_30], %45 {strides = array<i32>} : memref<16x1xf32, #tpu.memory_space<vmem>>, vector<16x1xf32>,
    return
  }
  func.func @transform_0(%arg0: i32) -> (i32, i32) {
    %c0_i32 = arith.constant 0 : i32
    %c0_i32_0 = arith.constant 0 : i32
    return %arg0, %c0_i32 : i32, i32
  }
  func.func @transform_1(%arg0: i32) -> (i32, i32) {
    %c0_i32 = arith.constant 0 : i32
    %c0_i32_0 = arith.constant 0 : i32
    return %arg0, %c0_i32 : i32, i32
  }
  func.func @transform_2(%arg0: i32) -> (i32, i32) {
    %c0_i32 = arith.constant 0 : i32
    %c0_i32_0 = arith.constant 0 : i32
    %c0_i32_1 = arith.constant 0 : i32
    return %c0_i32, %c0_i32_0 : i32, i32
  }
  func.func @transform_3(%arg0: i32) -> (i32, i32) {
    %c0_i32 = arith.constant 0 : i32
    %c0_i32_0 = arith.constant 0 : i32
    %c0_i32_1 = arith.constant 0 : i32
    return %c0_i32, %c0_i32_0 : i32, i32
  }
  func.func @transform_4(%arg0: i32) -> (i32, i32) {
    %c0_i32 = arith.constant 0 : i32
    %c0_i32_0 = arith.constant 0 : i32
    %c0_i32_1 = arith.constant 0 : i32
    return %c0_i32, %c0_i32_0 : i32, i32
  }
  func.func @transform_5(%arg0: i32) -> (i32, i32) {
    %c0_i32 = arith.constant 0 : i32
    %c0_i32_0 = arith.constant 0 : i32
    %c0_i32_1 = arith.constant 0 : i32
    return %c0_i32, %c0_i32_0 : i32, i32
  }
  func.func @transform_6(%arg0: i32) -> (i32, i32) {
    %c0_i32 = arith.constant 0 : i32
    %c0_i32_0 = arith.constant 0 : i32
    %c0_i32_1 = arith.constant 0 : i32
    return %c0_i32, %c0_i32_0 : i32, i32
  }
  func.func @transform_7(%arg0: i32) -> (i32, i32) {
    %c0_i32 = arith.constant 0 : i32
    %c0_i32_0 = arith.constant 0 : i32
    %c0_i32_1 = arith.constant 0 : i32
    return %c0_i32, %c0_i32_0 : i32, i32
  }
  func.func @transform_8(%arg0: i32) -> (i32, i32) {
    %c0_i32 = arith.constant 0 : i32
    %c0_i32_0 = arith.constant 0 : i32
    return %arg0, %c0_i32 : i32, i32
  }
}

</mosaic_0001>

<llo_original>
// kernel: tpu_custom_call.1
$region0: #{tpu_custom_call.1}
  #allocation0 [shape = 'u32[]', space=smem, size = 0x4, offset = 0x4, fixed_abs, tag = 'smem constant byte address 0x4 - core index']
  #allocation1 [shape = 'u32[144,128]{1,0:T(1,128)}', space=vmem, size = 0x12000, scoped, tag = 'internal scratch']
  %s0 = inlined_call_operand.vmem [shape: f32[16,32], index: 0, kind: input, shape index: {}]
  %s1 = inlined_call_operand.vmem [shape: f32[16,64], index: 1, kind: input, shape index: {}]
  %s2 = inlined_call_operand.vmem [shape: bf16[32,32], index: 2, kind: input, shape index: {}]
  %s3 = inlined_call_operand.vmem [shape: bf16[64,256], index: 3, kind: input, shape index: {}]
  %s4 = inlined_call_operand.vmem [shape: bf16[32,64], index: 4, kind: input, shape index: {}]
  %s5 = inlined_call_operand.vmem [shape: bf16[256,64], index: 5, kind: input, shape index: {}]
  %s6 = inlined_call_operand.vmem [shape: bf16[64,64], index: 6, kind: input, shape index: {}]
  %s7 = inlined_call_operand.vmem [shape: f32[1,896], index: 7, kind: input, shape index: {}]
  %s8 = inlined_call_operand.vmem [shape: f32[16,1], index: 8, kind: output, shape index: {}]
  %s9 = sld [smem:[#allocation0]]
  $region42: #{tpu_custom_call.1} parent=0
    _
  %s11 = ssub.s32 1, %s9
  %s12 = scalar_select 0, %s11, %s9
  // Predicated region
  $region2: #{tpu_custom_call.1} parent=0 // pred_check
    _
  $region3: #{tpu_custom_call.1} parent=0 // pred_check_branch
    %14 = sbr.rel (0) target = $region5
  $region4: #{tpu_custom_call.1} parent=0 // pred_region
    _
  $region5: #{tpu_custom_call.1} parent=0 // pred_fallthru
    _
  // Predicated region
  $region6: #{tpu_custom_call.1} parent=0 // pred_check
    _
  $region7: #{tpu_custom_call.1} parent=0 // pred_check_branch
    %16 = sbr.rel (0) target = $region9
  $region8: #{tpu_custom_call.1} parent=0 // pred_region
    _
  $region9: #{tpu_custom_call.1} parent=0 // pred_fallthru
    _
  // Predicated region
  $region10: #{tpu_custom_call.1} parent=0 // pred_check
    _
  $region11: #{tpu_custom_call.1} parent=0 // pred_check_branch
    %18 = sbr.rel (0) target = $region13
  $region12: #{tpu_custom_call.1} parent=0 // pred_region
    _
  $region13: #{tpu_custom_call.1} parent=0 // pred_fallthru
    _
  // Predicated region
  $region14: #{tpu_custom_call.1} parent=0 // pred_check
    _
  $region15: #{tpu_custom_call.1} parent=0 // pred_check_branch
    %20 = sbr.rel (0) target = $region17
  $region16: #{tpu_custom_call.1} parent=0 // pred_region
    _
  $region17: #{tpu_custom_call.1} parent=0 // pred_fallthru
    _
  // Predicated region
  $region18: #{tpu_custom_call.1} parent=0 // pred_check
    _
  $region19: #{tpu_custom_call.1} parent=0 // pred_check_branch
    %22 = sbr.rel (0) target = $region21
  $region20: #{tpu_custom_call.1} parent=0 // pred_region
    _
  $region21: #{tpu_custom_call.1} parent=0 // pred_fallthru
    _
  // Predicated region
  $region22: #{tpu_custom_call.1} parent=0 // pred_check
    _
  $region23: #{tpu_custom_call.1} parent=0 // pred_check_branch
    %24 = sbr.rel (0) target = $region25
  $region24: #{tpu_custom_call.1} parent=0 // pred_region
    _
  $region25: #{tpu_custom_call.1} parent=0 // pred_fallthru
    _
  // Predicated region
  $region26: #{tpu_custom_call.1} parent=0 // pred_check
    _
  $region27: #{tpu_custom_call.1} parent=0 // pred_check_branch
    %26 = sbr.rel (0) target = $region29
  $region28: #{tpu_custom_call.1} parent=0 // pred_region
    _
  $region29: #{tpu_custom_call.1} parent=0 // pred_fallthru
    _
  // Predicated region
  $region30: #{tpu_custom_call.1} parent=0 // pred_check
    _
  $region31: #{tpu_custom_call.1} parent=0 // pred_check_branch
    %28 = sbr.rel (0) target = $region33
  $region32: #{tpu_custom_call.1} parent=0 // pred_region
    _
  $region33: #{tpu_custom_call.1} parent=0 // pred_fallthru
    _
  %v30 = vld [vmem:[%s7] sm:$0x1]
  %v31 = vld [vmem:[%s7 + $0x1] sm:$0x3]
  %v32 = vld [vmem:[%s7 + $0x3] sm:$0x1]
  %v33 = vld [vmem:[%s7 + $0x4] sm:$0x1]
  %v34 = vld [vmem:[%s7 + $0x5] sm:$0x1]
  %v35 = vld [vmem:[%s7 + $0x6] sm:$0x1]
  %v36 = vld [vmem:[%s0] sm:$0xff]
  %v37 = vld [vmem:[%s0 + $0x8] sm:$0xff]
  %v38 = vpack.c.bf16 %v37, %v36
  %v39 = vld [vmem:[%s2] sm:$0xf]
  %v40 = vld [vmem:[%s2 + $0x4] sm:$0xf]
  %v41 = vld [vmem:[%s2 + $0x8] sm:$0xf]
  %v42 = vld [vmem:[%s2 + $0xc] sm:$0xf]
  %v44 = vlaneseq
  %v45 = vshrl.u32 %v44, 7
  %v46 = vsub.s32 0, %v45
  %v47 = vrot.slane %v30, %v46
  %v53 = vunpack.c.l.b16 %v39
  %v54 = vunpack.c.l.b16 %v40
  %v55 = vunpack.c.l.b16 %v41
  %v56 = vunpack.c.l.b16 %v42
  %v57 = vpack.c.b16 %v54, %v53
  %v58 = vpack.c.b16 %v56, %v55
  %vm61 = vcmask 261120
  %v63 = vsel %vm61, %v38, 0
  %65 = vmatprep.subr.bf16.mxu0 0
  %66 = vmatpush1.bf16.msra.mxu0 0
  %67 = vmatprep.subr.bf16.mxu0 0
  %68 = vmatpush1.bf16.msra.mxu0 0
  %69 = vmatprep.subr.bf16.mxu0 0
  %70 = vmatpush1.bf16.msra.mxu0 0
  %71 = vmatprep.subr.bf16.mxu0 0
  %72 = vmatpush1.bf16.msra.mxu0 0
  %73 = vmatprep.subr.bf16.mxu0 0
  %74 = vmatpush1.bf16.msra.mxu0 0
  %75 = vmatprep.subr.bf16.mxu0 0
  %76 = vmatpush1.bf16.msra.mxu0 0
  %77 = vmatprep.subr.bf16.mxu0 0
  %78 = vmatpush1.bf16.msra.mxu0 %v58
  %79 = vmatprep.subr.bf16.mxu0 0
  %80 = vmatpush1.bf16.msra.mxu0 %v57
  %81 = vmatprep.subr.bf16.mxu0 0
  %82 = vmatpush2.bf16.msra.mxu0 0
  %83 = vmatprep.subr.bf16.mxu0 0
  %84 = vmatpush2.bf16.msra.mxu0 0
  %85 = vmatprep.subr.bf16.mxu0 0
  %86 = vmatpush2.bf16.msra.mxu0 0
  %87 = vmatprep.subr.bf16.mxu0 0
  %88 = vmatpush2.bf16.msra.mxu0 0
  %89 = vmatprep.subr.bf16.mxu0 0
  %90 = vmatpush2.bf16.msra.mxu0 0
  %91 = vmatprep.subr.bf16.mxu0 0
  %92 = vmatpush2.bf16.msra.mxu0 0
  %93 = vmatprep.subr.bf16.mxu0 0
  %94 = vmatpush2.bf16.msra.mxu0 0
  %95 = vmatprep.subr.bf16.mxu0 0
  %96 = vmatpush2.bf16.msra.mxu0 0
  %97 = vmatprep.mubr.bf16.mxu0 0
  %98 = vmatmul.mubr.bf16.gmra.mxu0 %v63
  %v99 = vpop.f32.mrf.mxu0
  %v100 = vadd.f32 %v47, %v99
  %v101 = vpop.f32.mrf.mxu0
  %v102 = vpop.f32.mrf.mxu0
  %v103 = vadd.f32 %v47, %v102
  %v104 = vpop.f32.mrf.mxu0
  %105 = vdwg.mxu0
  %v106 = vmax.f32 %v100, 0.0
  %v107 = vmax.f32 %v103, 0.0
  %v108 = vld [vmem:[%s1] sm:$0xff]
  %v109 = vld [vmem:[%s1 + $0x8] sm:$0xff]
  %v110 = vpack.c.bf16 %v109, %v108
  %v111 = vld [vmem:[%s3] sm:$0xff]
  %v112 = vld [vmem:[%s3 + $0x8] sm:$0xff]
  %v113 = vld [vmem:[%s3 + $0x10] sm:$0xff]
  %v114 = vld [vmem:[%s3 + $0x18] sm:$0xff]
  %v115 = vld [vmem:[%s3 + $0x20] sm:$0xff]
  %v116 = vld [vmem:[%s3 + $0x28] sm:$0xff]
  %v117 = vld [vmem:[%s3 + $0x30] sm:$0xff]
  %v118 = vld [vmem:[%s3 + $0x38] sm:$0xff]
  %v120 = vlaneseq
  %v121 = vshrl.u32 %v120, 7
  %v122 = vsub.s32 0, %v121
  %v123 = vrot.slane %v31, %v122
  %v124 = vlaneseq
  %v125 = vshrl.u32 %v124, 7
  %v126 = vsub.s32 1, %v125
  %v127 = vrot.slane %v31, %v126
  %v138 = vunpack.c.l.b16 %v111
  %v139 = vunpack.c.h.b16 %v111
  %v140 = vunpack.c.l.b16 %v112
  %v141 = vunpack.c.h.b16 %v112
  %v142 = vunpack.c.l.b16 %v113
  %v143 = vunpack.c.h.b16 %v113
  %v144 = vunpack.c.l.b16 %v114
  %v145 = vunpack.c.h.b16 %v114
  %v146 = vunpack.c.l.b16 %v115
  %v147 = vunpack.c.h.b16 %v115
  %v148 = vunpack.c.l.b16 %v116
  %v149 = vunpack.c.h.b16 %v116
  %v150 = vunpack.c.l.b16 %v117
  %v151 = vunpack.c.h.b16 %v117
  %v152 = vunpack.c.l.b16 %v118
  %v153 = vunpack.c.h.b16 %v118
  %v154 = vpack.c.b16 %v140, %v138
  %v155 = vpack.c.b16 %v141, %v139
  %v156 = vpack.c.b16 %v144, %v142
  %v157 = vpack.c.b16 %v145, %v143
  %v158 = vpack.c.b16 %v148, %v146
  %v159 = vpack.c.b16 %v149, %v147
  %v160 = vpack.c.b16 %v152, %v150
  %v161 = vpack.c.b16 %v153, %v151
  %vm170 = vcmask 523264
  %v172 = vsel %vm170, %v110, 0
  %174 = vmatprep.subr.bf16.mxu0 0
  %175 = vmatpush1.bf16.msra.mxu0 0
  %176 = vmatprep.subr.bf16.mxu0 0
  %177 = vmatpush1.bf16.msra.mxu0 0
  %178 = vmatprep.subr.bf16.mxu0 0
  %179 = vmatpush1.bf16.msra.mxu0 0
  %180 = vmatprep.subr.bf16.mxu0 0
  %181 = vmatpush1.bf16.msra.mxu0 0
  %182 = vmatprep.subr.bf16.mxu0 %v161
  %183 = vmatpush1.bf16.msra.mxu0 %v160
  %184 = vmatprep.subr.bf16.mxu0 %v159
  %185 = vmatpush1.bf16.msra.mxu0 %v158
  %186 = vmatprep.subr.bf16.mxu0 %v157
  %187 = vmatpush1.bf16.msra.mxu0 %v156
  %188 = vmatprep.subr.bf16.mxu0 %v155
  %189 = vmatpush1.bf16.msra.mxu0 %v154
  %190 = vmatprep.subr.bf16.mxu0 0
  %191 = vmatpush2.bf16.msra.mxu0 0
  %192 = vmatprep.subr.bf16.mxu0 0
  %193 = vmatpush2.bf16.msra.mxu0 0
  %194 = vmatprep.subr.bf16.mxu0 0
  %195 = vmatpush2.bf16.msra.mxu0 0
  %196 = vmatprep.subr.bf16.mxu0 0
  %197 = vmatpush2.bf16.msra.mxu0 0
  %198 = vmatprep.subr.bf16.mxu0 0
  %199 = vmatpush2.bf16.msra.mxu0 0
  %200 = vmatprep.subr.bf16.mxu0 0
  %201 = vmatpush2.bf16.msra.mxu0 0
  %202 = vmatprep.subr.bf16.mxu0 0
  %203 = vmatpush2.bf16.msra.mxu0 0
  %204 = vmatprep.subr.bf16.mxu0 0
  %205 = vmatpush2.bf16.msra.mxu0 0
  %206 = vmatprep.mubr.bf16.mxu0 0
  %207 = vmatmul.mubr.bf16.gmra.mxu0 %v172
  %v208 = vpop.f32.mrf.mxu0
  %v209 = vadd.f32 %v123, %v208
  %v210 = vpop.f32.mrf.mxu0
  %v211 = vadd.f32 %v127, %v210
  %v212 = vpop.f32.mrf.mxu0
  %v213 = vadd.f32 %v123, %v212
  %v214 = vpop.f32.mrf.mxu0
  %v215 = vadd.f32 %v127, %v214
  %216 = vdwg.mxu0
  %v217 = vmax.f32 %v209, 0.0
  %v218 = vmax.f32 %v211, 0.0
  %v219 = vmax.f32 %v213, 0.0
  %v220 = vmax.f32 %v215, 0.0
  %v221 = vpack.c.bf16 %v107, %v106
  %v222 = vld [vmem:[%s4] sm:$0xf]
  %v223 = vld [vmem:[%s4 + $0x4] sm:$0xf]
  %v224 = vld [vmem:[%s4 + $0x8] sm:$0xf]
  %v225 = vld [vmem:[%s4 + $0xc] sm:$0xf]
  %v226 = vpack.c.bf16 %v219, %v217
  %v227 = vpack.c.bf16 %v220, %v218
  %v228 = vld [vmem:[%s5] sm:$0xf]
  %v229 = vld [vmem:[%s5 + $0x4] sm:$0xf]
  %v230 = vld [vmem:[%s5 + $0x8] sm:$0xf]
  %v231 = vld [vmem:[%s5 + $0xc] sm:$0xf]
  %v232 = vld [vmem:[%s5 + $0x10] sm:$0xf]
  %v233 = vld [vmem:[%s5 + $0x14] sm:$0xf]
  %v234 = vld [vmem:[%s5 + $0x18] sm:$0xf]
  %v235 = vld [vmem:[%s5 + $0x1c] sm:$0xf]
  %v236 = vld [vmem:[%s5 + $0x20] sm:$0xf]
  %v237 = vld [vmem:[%s5 + $0x24] sm:$0xf]
  %v238 = vld [vmem:[%s5 + $0x28] sm:$0xf]
  %v239 = vld [vmem:[%s5 + $0x2c] sm:$0xf]
  %v240 = vld [vmem:[%s5 + $0x30] sm:$0xf]
  %v241 = vld [vmem:[%s5 + $0x34] sm:$0xf]
  %v242 = vld [vmem:[%s5 + $0x38] sm:$0xf]
  %v243 = vld [vmem:[%s5 + $0x3c] sm:$0xf]
  %v244 = vld [vmem:[%s5 + $0x40] sm:$0xf]
  %v245 = vld [vmem:[%s5 + $0x44] sm:$0xf]
  %v246 = vld [vmem:[%s5 + $0x48] sm:$0xf]
  %v247 = vld [vmem:[%s5 + $0x4c] sm:$0xf]
  %v248 = vld [vmem:[%s5 + $0x50] sm:$0xf]
  %v249 = vld [vmem:[%s5 + $0x54] sm:$0xf]
  %v250 = vld [vmem:[%s5 + $0x58] sm:$0xf]
  %v251 = vld [vmem:[%s5 + $0x5c] sm:$0xf]
  %v252 = vld [vmem:[%s5 + $0x60] sm:$0xf]
  %v253 = vld [vmem:[%s5 + $0x64] sm:$0xf]
  %v254 = vld [vmem:[%s5 + $0x68] sm:$0xf]
  %v255 = vld [vmem:[%s5 + $0x6c] sm:$0xf]
  %v256 = vld [vmem:[%s5 + $0x70] sm:$0xf]
  %v257 = vld [vmem:[%s5 + $0x74] sm:$0xf]
  %v258 = vld [vmem:[%s5 + $0x78] sm:$0xf]
  %v259 = vld [vmem:[%s5 + $0x7c] sm:$0xf]
  %v292 = vunpack.c.l.b16 %v228
  %v293 = vunpack.c.l.b16 %v229
  %v294 = vunpack.c.l.b16 %v230
  %v295 = vunpack.c.l.b16 %v231
  %v296 = vunpack.c.l.b16 %v232
  %v297 = vunpack.c.l.b16 %v233
  %v298 = vunpack.c.l.b16 %v234
  %v299 = vunpack.c.l.b16 %v235
  %v300 = vunpack.c.l.b16 %v236
  %v301 = vunpack.c.l.b16 %v237
  %v302 = vunpack.c.l.b16 %v238
  %v303 = vunpack.c.l.b16 %v239
  %v304 = vunpack.c.l.b16 %v240
  %v305 = vunpack.c.l.b16 %v241
  %v306 = vunpack.c.l.b16 %v242
  %v307 = vunpack.c.l.b16 %v243
  %v308 = vunpack.c.l.b16 %v244
  %v309 = vunpack.c.l.b16 %v245
  %v310 = vunpack.c.l.b16 %v246
  %v311 = vunpack.c.l.b16 %v247
  %v312 = vunpack.c.l.b16 %v248
  %v313 = vunpack.c.l.b16 %v249
  %v314 = vunpack.c.l.b16 %v250
  %v315 = vunpack.c.l.b16 %v251
  %v316 = vunpack.c.l.b16 %v252
  %v317 = vunpack.c.l.b16 %v253
  %v318 = vunpack.c.l.b16 %v254
  %v319 = vunpack.c.l.b16 %v255
  %v320 = vunpack.c.l.b16 %v256
  %v321 = vunpack.c.l.b16 %v257
  %v322 = vunpack.c.l.b16 %v258
  %v323 = vunpack.c.l.b16 %v259
  %v324 = vpack.c.b16 %v293, %v292
  %v325 = vpack.c.b16 %v295, %v294
  %v326 = vpack.c.b16 %v297, %v296
  %v327 = vpack.c.b16 %v299, %v298
  %v328 = vpack.c.b16 %v301, %v300
  %v329 = vpack.c.b16 %v303, %v302
  %v330 = vpack.c.b16 %v305, %v304
  %v331 = vpack.c.b16 %v307, %v306
  %v332 = vpack.c.b16 %v309, %v308
  %v333 = vpack.c.b16 %v311, %v310
  %v334 = vpack.c.b16 %v313, %v312
  %v335 = vpack.c.b16 %v315, %v314
  %v336 = vpack.c.b16 %v317, %v316
  %v337 = vpack.c.b16 %v319, %v318
  %v338 = vpack.c.b16 %v321, %v320
  %v339 = vpack.c.b16 %v323, %v322
  %356 = vmatprep.subr.bf16.mxu0 0
  %357 = vmatpush1.bf16.msra.mxu0 %v331
  %358 = vmatprep.subr.bf16.mxu0 0
  %359 = vmatpush1.bf16.msra.mxu0 %v330
  %360 = vmatprep.subr.bf16.mxu0 0
  %361 = vmatpush1.bf16.msra.mxu0 %v329
  %362 = vmatprep.subr.bf16.mxu0 0
  %363 = vmatpush1.bf16.msra.mxu0 %v328
  %364 = vmatprep.subr.bf16.mxu0 0
  %365 = vmatpush1.bf16.msra.mxu0 %v327
  %366 = vmatprep.subr.bf16.mxu0 0
  %367 = vmatpush1.bf16.msra.mxu0 %v326
  %368 = vmatprep.subr.bf16.mxu0 0
  %369 = vmatpush1.bf16.msra.mxu0 %v325
  %370 = vmatprep.subr.bf16.mxu0 0
  %371 = vmatpush1.bf16.msra.mxu0 %v324
  %372 = vmatprep.subr.bf16.mxu0 0
  %373 = vmatpush2.bf16.msra.mxu0 %v339
  %374 = vmatprep.subr.bf16.mxu0 0
  %375 = vmatpush2.bf16.msra.mxu0 %v338
  %376 = vmatprep.subr.bf16.mxu0 0
  %377 = vmatpush2.bf16.msra.mxu0 %v337
  %378 = vmatprep.subr.bf16.mxu0 0
  %379 = vmatpush2.bf16.msra.mxu0 %v336
  %380 = vmatprep.subr.bf16.mxu0 0
  %381 = vmatpush2.bf16.msra.mxu0 %v335
  %382 = vmatprep.subr.bf16.mxu0 0
  %383 = vmatpush2.bf16.msra.mxu0 %v334
  %384 = vmatprep.subr.bf16.mxu0 0
  %385 = vmatpush2.bf16.msra.mxu0 %v333
  %386 = vmatprep.subr.bf16.mxu0 0
  %387 = vmatpush2.bf16.msra.mxu0 %v332
  %388 = vmatprep.mubr.bf16.mxu0 %v227
  %389 = vmatmul.mubr.bf16.gmra.mxu0 %v226
  %v390 = vpop.f32.mrf.mxu0
  %v391 = vadd.f32 0.0, %v390
  %v392 = vpop.f32.mrf.mxu0
  %v393 = vpop.f32.mrf.mxu0
  %v394 = vadd.f32 0.0, %v393
  %v395 = vpop.f32.mrf.mxu0
  %396 = vdwg.mxu0
  %v401 = vunpack.c.l.b16 %v222
  %v402 = vunpack.c.l.b16 %v223
  %v403 = vunpack.c.l.b16 %v224
  %v404 = vunpack.c.l.b16 %v225
  %v405 = vpack.c.b16 %v402, %v401
  %v406 = vpack.c.b16 %v404, %v403
  %v410 = vsel %vm61, %v221, 0
  %412 = vmatprep.subr.bf16.mxu0 0
  %413 = vmatpush1.bf16.msra.mxu0 0
  %414 = vmatprep.subr.bf16.mxu0 0
  %415 = vmatpush1.bf16.msra.mxu0 0
  %416 = vmatprep.subr.bf16.mxu0 0
  %417 = vmatpush1.bf16.msra.mxu0 0
  %418 = vmatprep.subr.bf16.mxu0 0
  %419 = vmatpush1.bf16.msra.mxu0 0
  %420 = vmatprep.subr.bf16.mxu0 0
  %421 = vmatpush1.bf16.msra.mxu0 0
  %422 = vmatprep.subr.bf16.mxu0 0
  %423 = vmatpush1.bf16.msra.mxu0 0
  %424 = vmatprep.subr.bf16.mxu0 0
  %425 = vmatpush1.bf16.msra.mxu0 %v406
  %426 = vmatprep.subr.bf16.mxu0 0
  %427 = vmatpush1.bf16.msra.mxu0 %v405
  %428 = vmatprep.subr.bf16.mxu0 0
  %429 = vmatpush2.bf16.msra.mxu0 0
  %430 = vmatprep.subr.bf16.mxu0 0
  %431 = vmatpush2.bf16.msra.mxu0 0
  %432 = vmatprep.subr.bf16.mxu0 0
  %433 = vmatpush2.bf16.msra.mxu0 0
  %434 = vmatprep.subr.bf16.mxu0 0
  %435 = vmatpush2.bf16.msra.mxu0 0
  %436 = vmatprep.subr.bf16.mxu0 0
  %437 = vmatpush2.bf16.msra.mxu0 0
  %438 = vmatprep.subr.bf16.mxu0 0
  %439 = vmatpush2.bf16.msra.mxu0 0
  %440 = vmatprep.subr.bf16.mxu0 0
  %441 = vmatpush2.bf16.msra.mxu0 0
  %442 = vmatprep.subr.bf16.mxu0 0
  %443 = vmatpush2.bf16.msra.mxu0 0
  %444 = vmatprep.mubr.bf16.mxu0 0
  %445 = vmatmul.mubr.bf16.gmra.mxu0 %v410
  %v446 = vpop.f32.mrf.mxu0
  %v447 = vadd.f32 %v391, %v446
  %v448 = vpop.f32.mrf.mxu0
  %v449 = vpop.f32.mrf.mxu0
  %v450 = vadd.f32 %v394, %v449
  %v451 = vpop.f32.mrf.mxu0
  %452 = vdwg.mxu0
  %v454 = vlaneseq
  %v455 = vshrl.u32 %v454, 7
  %v456 = vsub.s32 0, %v455
  %v457 = vrot.slane %v32, %v456
  %v459 = vadd.f32 %v447, %v457
  %v460 = vadd.f32 %v450, %v457
  %v461 = vmax.f32 %v459, 0.0
  %v462 = vmax.f32 %v460, 0.0
  %v463 = vpack.c.bf16 %v462, %v461
  %v464 = vld [vmem:[%s6] sm:$0xf]
  %v465 = vld [vmem:[%s6 + $0x4] sm:$0xf]
  %v466 = vld [vmem:[%s6 + $0x8] sm:$0xf]
  %v467 = vld [vmem:[%s6 + $0xc] sm:$0xf]
  %v468 = vld [vmem:[%s6 + $0x10] sm:$0xf]
  %v469 = vld [vmem:[%s6 + $0x14] sm:$0xf]
  %v470 = vld [vmem:[%s6 + $0x18] sm:$0xf]
  %v471 = vld [vmem:[%s6 + $0x1c] sm:$0xf]
  %v473 = vlaneseq
  %v474 = vshrl.u32 %v473, 7
  %v475 = vsub.s32 0, %v474
  %v476 = vrot.slane %v33, %v475
  %v486 = vunpack.c.l.b16 %v464
  %v487 = vunpack.c.l.b16 %v465
  %v488 = vunpack.c.l.b16 %v466
  %v489 = vunpack.c.l.b16 %v467
  %v490 = vunpack.c.l.b16 %v468
  %v491 = vunpack.c.l.b16 %v469
  %v492 = vunpack.c.l.b16 %v470
  %v493 = vunpack.c.l.b16 %v471
  %v494 = vpack.c.b16 %v487, %v486
  %v495 = vpack.c.b16 %v489, %v488
  %v496 = vpack.c.b16 %v491, %v490
  %v497 = vpack.c.b16 %v493, %v492
  %v503 = vsel %vm170, %v463, 0
  %505 = vmatprep.subr.bf16.mxu0 0
  %506 = vmatpush1.bf16.msra.mxu0 0
  %507 = vmatprep.subr.bf16.mxu0 0
  %508 = vmatpush1.bf16.msra.mxu0 0
  %509 = vmatprep.subr.bf16.mxu0 0
  %510 = vmatpush1.bf16.msra.mxu0 0
  %511 = vmatprep.subr.bf16.mxu0 0
  %512 = vmatpush1.bf16.msra.mxu0 0
  %513 = vmatprep.subr.bf16.mxu0 0
  %514 = vmatpush1.bf16.msra.mxu0 %v497
  %515 = vmatprep.subr.bf16.mxu0 0
  %516 = vmatpush1.bf16.msra.mxu0 %v496
  %517 = vmatprep.subr.bf16.mxu0 0
  %518 = vmatpush1.bf16.msra.mxu0 %v495
  %519 = vmatprep.subr.bf16.mxu0 0
  %520 = vmatpush1.bf16.msra.mxu0 %v494
  %521 = vmatprep.subr.bf16.mxu0 0
  %522 = vmatpush2.bf16.msra.mxu0 0
  %523 = vmatprep.subr.bf16.mxu0 0
  %524 = vmatpush2.bf16.msra.mxu0 0
  %525 = vmatprep.subr.bf16.mxu0 0
  %526 = vmatpush2.bf16.msra.mxu0 0
  %527 = vmatprep.subr.bf16.mxu0 0
  %528 = vmatpush2.bf16.msra.mxu0 0
  %529 = vmatprep.subr.bf16.mxu0 0
  %530 = vmatpush2.bf16.msra.mxu0 0
  %531 = vmatprep.subr.bf16.mxu0 0
  %532 = vmatpush2.bf16.msra.mxu0 0
  %533 = vmatprep.subr.bf16.mxu0 0
  %534 = vmatpush2.bf16.msra.mxu0 0
  %535 = vmatprep.subr.bf16.mxu0 0
  %536 = vmatpush2.bf16.msra.mxu0 0
  %537 = vmatprep.mubr.bf16.mxu0 0
  %538 = vmatmul.mubr.bf16.gmra.mxu0 %v503
  %v539 = vpop.f32.mrf.mxu0
  %v540 = vadd.f32 %v476, %v539
  %v541 = vpop.f32.mrf.mxu0
  %v542 = vpop.f32.mrf.mxu0
  %v543 = vadd.f32 %v476, %v542
  %v544 = vpop.f32.mrf.mxu0
  %545 = vdwg.mxu0
  %v546 = vmax.f32 %v540, 0.0
  %v547 = vmax.f32 %v543, 0.0
  %v549 = vlaneseq
  %v550 = vshrl.u32 %v549, 7
  %v551 = vsub.s32 0, %v550
  %v552 = vrot.slane %v34, %v551
  %v554 = vmul.f32 %v546, %v552
  %v555 = vmul.f32 %v547, %v552
  %v556 = vsel %vm170, %v554, 0.0
  %557 = vadd.xlane.f32.xlu0 %v556
  %v558 = vpop.xlane.xlu0 %557
  %v559 = vsel %vm170, %v555, 0.0
  %560 = vadd.xlane.f32.xlu0 %v559
  %v561 = vpop.xlane.xlu0 %560
  %v563 = vlaneseq
  %v564 = vshrl.u32 %v563, 7
  %v565 = vsub.s32 0, %v564
  %v566 = vrot.slane %v35, %v565
  %v568 = vadd.f32 %v558, %v566
  %v569 = vadd.f32 %v561, %v566
  %vm570 = vcmask 7168
  %571 = vst.msk [vmem:[%s8] sm:$0xff] %vm570, %v568
  %572 = vst.msk [vmem:[%s8 + $0x8] sm:$0xff] %vm570, %v569
  // Predicated region
  $region34: #{tpu_custom_call.1} parent=0 // pred_check
    _
  $region35: #{tpu_custom_call.1} parent=0 // pred_check_branch
    %574 = sbr.rel (0) target = $region37
  $region36: #{tpu_custom_call.1} parent=0 // pred_region
    _
  $region37: #{tpu_custom_call.1} parent=0 // pred_fallthru
    _
  // Predicated region
  $region38: #{tpu_custom_call.1} parent=0 // pred_check
    _
  $region39: #{tpu_custom_call.1} parent=0 // pred_check_branch
    %576 = sbr.rel (0) target = $region41
  $region40: #{tpu_custom_call.1} parent=0 // pred_region
    _
  $region41: #{tpu_custom_call.1} parent=0 // pred_fallthru
    _

</llo_original>
